<compile_context>
chip_gen: v7x
topology: tpu7x:2x2x1
jax: 0.10.0
libtpu: 0.0.40
codegen_flags: <defaults>
</compile_context>

<pallas_src>
import jax
import jax.numpy as jnp
import numpy as np
from jax import lax
from jax.experimental import pallas as pl
from jax.experimental.pallas import tpu as pltpu

SUB = 8      # f32 sublanes per vreg
LANE = 128   # lanes per vreg
MAX_STAGE1_LANES = 16 * 1024   # cap per-step lane tile (keeps code size / vreg pressure sane)


# ---------------------------------------------------------------------------
# Stage 1: per-pixel channel-sum of |x - y|   (B, C, SUB, NS) -> (B, SUB, NS)
# ---------------------------------------------------------------------------
def _res_kernel(x_ref, y_ref, res_ref):
    # x_ref, y_ref: (1, C, SUB, TNS); res_ref: (1, SUB, TNS)
    c_dim = x_ref.shape[1]
    acc = jnp.zeros(res_ref.shape[1:], jnp.float32)
    for c in range(c_dim):  # small static C: unrolled per-channel VPU adds
        acc = acc + jnp.abs(x_ref[0, c].astype(jnp.float32)
                            - y_ref[0, c].astype(jnp.float32))
    res_ref[0] = acc


# ---------------------------------------------------------------------------
# Stage 2 (fused): exact rank-k threshold + masked sum, one batch per grid step
# ---------------------------------------------------------------------------
def _make_stage2_kernel(hard_thre_ind):
    kp1 = hard_thre_ind + 1  # threshold t satisfies count(res >= t) >= kp1

    def kernel(res_ref, rand_ref, out_ref):
        # res_ref: (1, SUB, NS) f32 (res >= 0); rand_ref: (1, SUB, NS) int8
        # out_ref: (1, 1, 1) f32 per-batch masked sum.
        def res_bits():
            # int32 bit pattern is strictly monotone for non-negative f32.
            return pltpu.bitcast(res_ref[0], jnp.int32)

        # Exact value at index `hard_thre_ind` of the descending sort:
        #   t_bits = max{ m : count(bits >= m) >= kp1 }
        # via binary search on the int32 bit space (31 steps cover [0, +inf]).
        def body(_, carry):
            lo, hi = carry
            mid = lo + (hi - lo + 1) // 2
            cnt = jnp.sum((res_bits() >= mid).astype(jnp.int32))
            ge = cnt >= kp1
            return jnp.where(ge, mid, lo), jnp.where(ge, hi, mid - 1)

        t_bits, _ = lax.fori_loop(
            0, 31, body, (jnp.int32(0), jnp.int32(0x7F800000)))

        res = res_ref[0]
        # res > thre  <=>  bits > t_bits  (bit-exact strict compare)
        keep = jnp.logical_or(res_bits() > t_bits,
                              rand_ref[0].astype(jnp.int32) != 0)
        total = jnp.sum(jnp.where(keep, res, 0.0))
        out_ref[...] = total.reshape(1, 1, 1)

    return kernel


# ---------------------------------------------------------------------------
# Sizing helpers (generation-aware)
# ---------------------------------------------------------------------------
def _vmem_limit_bytes():
    """VMEM limit: ~48 MiB on v7x (64 MiB physical), ~100 MiB on v5e/v6e (128 MiB)."""
    cap = 64 * 1024 * 1024  # conservative default = v7x physical VMEM
    try:
        cap = int(pltpu.get_tpu_info().vmem_capacity_bytes)
    except Exception:
        pass
    return int(min(max(cap - 16 * 1024 * 1024, 32 * 1024 * 1024), 100 * 1024 * 1024))


def _pick_lane_tile(ns, max_lanes):
    """Largest lane tile (multiple of 128) that divides ns and is <= max_lanes."""
    t = min(ns, max(LANE, (max_lanes // LANE) * LANE))
    while t > LANE and ns % t != 0:
        t -= LANE
    return t


# ---------------------------------------------------------------------------
# Public entry point
# ---------------------------------------------------------------------------
def hem_loss(x, y, rand_mask, *, loss_weight=1.0, hard_thre_p=0.5):
    B, C, H, W = x.shape
    N = H * W

    # Pad flattened spatial axis to a multiple of SUB*LANE, fold to (SUB, NS).
    N_pad = -(-N // (SUB * LANE)) * (SUB * LANE)
    pad = N_pad - N
    NS = N_pad // SUB

    x3 = x.reshape(B, C, N)
    y3 = y.reshape(B, C, N)
    rand2 = rand_mask.reshape(B, N)
    if jnp.issubdtype(rand2.dtype, jnp.floating):
        rand2 = rand2 > 0.0
    rand2 = rand2.astype(jnp.int8)  # narrow dtype: 4x less Stage-2 mask traffic

    if pad:
        x3 = jnp.pad(x3, ((0, 0), (0, 0), (0, pad)))
        y3 = jnp.pad(y3, ((0, 0), (0, 0), (0, pad)))
        rand2 = jnp.pad(rand2, ((0, 0), (0, pad)))

    x4 = x3.reshape(B, C, SUB, NS)
    y4 = y3.reshape(B, C, SUB, NS)
    rand3 = rand2.reshape(B, SUB, NS)

    vmem_limit = _vmem_limit_bytes()

    # ---- Stage 1: res = sum_c |x - y| (HBM-bound streaming, big lane tiles) ----
    in_bytes = x.dtype.itemsize + y.dtype.itemsize
    # double-buffered x & y blocks + double-buffered f32 res output, per lane:
    bytes_per_lane = SUB * (2 * C * in_bytes + 2 * 4)
    max_lanes = min((vmem_limit // 2) // bytes_per_lane, MAX_STAGE1_LANES)
    if B == 1:
        # keep >= 2 parallel grid steps so both v7x TensorCores get work
        max_lanes = min(max_lanes, max(LANE, NS // 2))
    tns = _pick_lane_tile(NS, max_lanes)
    n_t = NS // tns

    res = pl.pallas_call(
        _res_kernel,
        out_shape=jax.ShapeDtypeStruct((B, SUB, NS), jnp.float32),
        grid=(B, n_t),
        in_specs=[
            pl.BlockSpec((1, C, SUB, tns), lambda b, t: (b, 0, 0, t)),
            pl.BlockSpec((1, C, SUB, tns), lambda b, t: (b, 0, 0, t)),
        ],
        out_specs=pl.BlockSpec((1, SUB, tns), lambda b, t: (b, 0, t)),
        compiler_params=pltpu.CompilerParams(
            dimension_semantics=("parallel", "parallel"),
            vmem_limit_bytes=vmem_limit,
        ),
    )(x4, y4)

    # Hard-example threshold index (clamped; PyTorch would raise at p == 1.0).
    hard_thre_ind = min(int(hard_thre_p * H * W), N - 1)

    # ---- Stage 2: fused exact-rank-k threshold + masked sum, one batch/step ----
    partial = pl.pallas_call(
        _make_stage2_kernel(hard_thre_ind),
        out_shape=jax.ShapeDtypeStruct((B, 1, 1), jnp.float32),
        grid=(B,),
        in_specs=[
            pl.BlockSpec((1, SUB, NS), lambda b: (b, 0, 0)),   # res (f32)
            pl.BlockSpec((1, SUB, NS), lambda b: (b, 0, 0)),   # rand (int8)
        ],
        out_specs=pl.BlockSpec((1, 1, 1), lambda b: (b, 0, 0)),
        compiler_params=pltpu.CompilerParams(
            dimension_semantics=("parallel",),
            vmem_limit_bytes=vmem_limit,
        ),
    )(res, rand3)

    total = jnp.sum(partial)
    return loss_weight * total / (B * C * H * W)


def make_random_mask(key, B, H, W, random_thre_p=0.1):
    """Deterministic (PRNGKey) stand-in for np.random.shuffle; int8 (B,1,H,W)."""
    n = H * W
    k = int(random_thre_p * n)
    base = (jnp.arange(n) < k).astype(jnp.int8)
    keys = jax.random.split(key, B)
    masks = jax.vmap(lambda kk: jax.random.permutation(kk, base))(keys)
    return masks.reshape(B, 1, H, W)


def hem_loss_ref(x, y, rand_mask, loss_weight=1.0, hard_thre_p=0.5):
    """Pure-JAX reference reproducing the PyTorch forward."""
    B, C, H, W = x.shape
    res = jnp.sum(jnp.abs(x - y), axis=1, keepdims=True)
    idx = min(int(hard_thre_p * H * W), H * W - 1)
    thre = -jnp.sort(-res.reshape(B, -1), axis=-1)[:, idx]
    hard = (res > thre[:, None, None, None]).astype(jnp.float32)
    mask = ((hard + rand_mask.astype(jnp.float32)) > 0.0).astype(jnp.float32)
    return loss_weight * jnp.mean(jnp.abs(x * mask - y * mask))


if __name__ == "__main__":
    B, C, H, W = 2, 4, 16, 16
    key = jax.random.PRNGKey(0)
    kx, ky, km = jax.random.split(key, 3)
    x = jax.random.normal(kx, (B, C, H, W), dtype=jnp.float32)
    y = jax.random.normal(ky, (B, C, H, W), dtype=jnp.float32)
    rand_mask = make_random_mask(km, B, H, W, random_thre_p=0.1)

    loss = hem_loss(x, y, rand_mask, loss_weight=1.0, hard_thre_p=0.5)
    loss = jax.block_until_ready(loss)

    ref = hem_loss_ref(x, y, rand_mask, loss_weight=1.0, hard_thre_p=0.5)
    assert np.allclose(np.asarray(loss), np.asarray(ref), rtol=1e-4, atol=1e-5), (
        float(loss), float(ref))

    print("KERNEL_OK")
</pallas_src>

<mosaic_0001>
module attributes {stable_mosaic.version = 11 : i64} {
  func.func @_res_kernel(%arg0: i32, %arg1: i32, %arg2: memref<1x4x8x128xf32, #tpu.memory_space<vmem>>, %arg3: memref<1x4x8x128xf32, #tpu.memory_space<vmem>>, %arg4: memref<1x8x128xf32, #tpu.memory_space<vmem>>) attributes {dimension_semantics = [#tpu.dimension_semantics<parallel>, #tpu.dimension_semantics<parallel>], iteration_bounds = array<i64: 2, 1>, scalar_prefetch = 0 : i64, scratch_operands = 0 : i64, tpu.core_type = #tpu.core_type<tc>, window_params = [{transform_indices = @transform_0, window_bounds = array<i64: 1, 4, 8, 128>}, {transform_indices = @transform_1, window_bounds = array<i64: 1, 4, 8, 128>}, {transform_indices = @transform_2, window_bounds = array<i64: 1, 8, 128>}]} {
    %cst = arith.constant 0.000000e+00 : f32
    %0 = vector.broadcast %cst : f32 to vector<8x128xf32>
    %c0 = arith.constant 0 : index
    %c0_0 = arith.constant 0 : index
    %c0_1 = arith.constant 0 : index
    %c0_2 = arith.constant 0 : index
    %1 = vector.load %arg2[%c0, %c0_0, %c0_1, %c0_2] : memref<1x4x8x128xf32, #tpu.memory_space<vmem>>, vector<1x1x8x128xf32>
    %2 = vector.shape_cast %1 : vector<1x1x8x128xf32> to vector<8x128xf32>
    %c0_3 = arith.constant 0 : index
    %c0_4 = arith.constant 0 : index
    %c0_5 = arith.constant 0 : index
    %c0_6 = arith.constant 0 : index
    %3 = vector.load %arg3[%c0_3, %c0_4, %c0_5, %c0_6] : memref<1x4x8x128xf32, #tpu.memory_space<vmem>>, vector<1x1x8x128xf32>
    %4 = vector.shape_cast %3 : vector<1x1x8x128xf32> to vector<8x128xf32>
    %5 = arith.subf %2, %4 : vector<8x128xf32>
    %6 = math.absf %5 : vector<8x128xf32>
    %7 = arith.addf %0, %6 : vector<8x128xf32>
    %c0_7 = arith.constant 0 : index
    %c1 = arith.constant 1 : index
    %c0_8 = arith.constant 0 : index
    %c0_9 = arith.constant 0 : index
    %8 = vector.load %arg2[%c0_7, %c1, %c0_8, %c0_9] : memref<1x4x8x128xf32, #tpu.memory_space<vmem>>, vector<1x1x8x128xf32>
    %9 = vector.shape_cast %8 : vector<1x1x8x128xf32> to vector<8x128xf32>
    %c0_10 = arith.constant 0 : index
    %c1_11 = arith.constant 1 : index
    %c0_12 = arith.constant 0 : index
    %c0_13 = arith.constant 0 : index
    %10 = vector.load %arg3[%c0_10, %c1_11, %c0_12, %c0_13] : memref<1x4x8x128xf32, #tpu.memory_space<vmem>>, vector<1x1x8x128xf32>
    %11 = vector.shape_cast %10 : vector<1x1x8x128xf32> to vector<8x128xf32>
    %12 = arith.subf %9, %11 : vector<8x128xf32>
    %13 = math.absf %12 : vector<8x128xf32>
    %14 = arith.addf %7, %13 : vector<8x128xf32>
    %c0_14 = arith.constant 0 : index
    %c2 = arith.constant 2 : index
    %c0_15 = arith.constant 0 : index
    %c0_16 = arith.constant 0 : index
    %15 = vector.load %arg2[%c0_14, %c2, %c0_15, %c0_16] : memref<1x4x8x128xf32, #tpu.memory_space<vmem>>, vector<1x1x8x128xf32>
    %16 = vector.shape_cast %15 : vector<1x1x8x128xf32> to vector<8x128xf32>
    %c0_17 = arith.constant 0 : index
    %c2_18 = arith.constant 2 : index
    %c0_19 = arith.constant 0 : index
    %c0_20 = arith.constant 0 : index
    %17 = vector.load %arg3[%c0_17, %c2_18, %c0_19, %c0_20] : memref<1x4x8x128xf32, #tpu.memory_space<vmem>>, vector<1x1x8x128xf32>
    %18 = vector.shape_cast %17 : vector<1x1x8x128xf32> to vector<8x128xf32>
    %19 = arith.subf %16, %18 : vector<8x128xf32>
    %20 = math.absf %19 : vector<8x128xf32>
    %21 = arith.addf %14, %20 : vector<8x128xf32>
    %c0_21 = arith.constant 0 : index
    %c3 = arith.constant 3 : index
    %c0_22 = arith.constant 0 : index
    %c0_23 = arith.constant 0 : index
    %22 = vector.load %arg2[%c0_21, %c3, %c0_22, %c0_23] : memref<1x4x8x128xf32, #tpu.memory_space<vmem>>, vector<1x1x8x128xf32>
    %23 = vector.shape_cast %22 : vector<1x1x8x128xf32> to vector<8x128xf32>
    %c0_24 = arith.constant 0 : index
    %c3_25 = arith.constant 3 : index
    %c0_26 = arith.constant 0 : index
    %c0_27 = arith.constant 0 : index
    %24 = vector.load %arg3[%c0_24, %c3_25, %c0_26, %c0_27] : memref<1x4x8x128xf32, #tpu.memory_space<vmem>>, vector<1x1x8x128xf32>
    %25 = vector.shape_cast %24 : vector<1x1x8x128xf32> to vector<8x128xf32>
    %26 = arith.subf %23, %25 : vector<8x128xf32>
    %27 = math.absf %26 : vector<8x128xf32>
    %28 = arith.addf %21, %27 : vector<8x128xf32>
    %c0_28 = arith.constant 0 : index
    %c0_29 = arith.constant 0 : index
    %c0_30 = arith.constant 0 : index
    %29 = vector.load %arg4[%c0_28, %c0_29, %c0_30] : memref<1x8x128xf32, #tpu.memory_space<vmem>>, vector<1x8x128xf32>
    %30 = vector.shape_cast %29 : vector<1x8x128xf32> to vector<8x128xf32>
    %31 = vector.shape_cast %28 : vector<8x128xf32> to vector<1x8x128xf32>
    tpu.vector_store %arg4[%c0_28, %c0_29, %c0_30], %31 {strides = array<i32>} : memref<1x8x128xf32, #tpu.memory_space<vmem>>, vector<1x8x128xf32>,
    return
  }
  func.func @transform_0(%arg0: i32, %arg1: i32) -> (i32, i32, i32, i32) {
    %c0_i32 = arith.constant 0 : i32
    %c0_i32_0 = arith.constant 0 : i32
    %c0_i32_1 = arith.constant 0 : i32
    return %arg0, %c0_i32, %c0_i32_0, %arg1 : i32, i32, i32, i32
  }
  func.func @transform_1(%arg0: i32, %arg1: i32) -> (i32, i32, i32, i32) {
    %c0_i32 = arith.constant 0 : i32
    %c0_i32_0 = arith.constant 0 : i32
    %c0_i32_1 = arith.constant 0 : i32
    return %arg0, %c0_i32, %c0_i32_0, %arg1 : i32, i32, i32, i32
  }
  func.func @transform_2(%arg0: i32, %arg1: i32) -> (i32, i32, i32) {
    %c0_i32 = arith.constant 0 : i32
    %c0_i32_0 = arith.constant 0 : i32
    return %arg0, %c0_i32, %arg1 : i32, i32, i32
  }
}

</mosaic_0001>

<llo_original>
// kernel: tpu_custom_call.1
$region0: #{tpu_custom_call.1}
  #allocation0 [shape = 'u32[]', space=smem, size = 0x4, offset = 0x4, fixed_abs, tag = 'smem constant byte address 0x4 - core index']
  #allocation1 [shape = 'u32[144,128]{1,0:T(1,128)}', space=vmem, size = 0x12000, scoped, tag = 'internal scratch']
  %s0 = inlined_call_operand.hbm [shape: f32[2,4,8,128], index: 0, kind: input, shape index: {}]
  %s1 = inlined_call_operand.hbm [shape: f32[2,4,8,128], index: 1, kind: input, shape index: {}]
  %s2 = inlined_call_operand.hbm [shape: f32[2,8,128], index: 2, kind: output, shape index: {}]
  %s3 = sld [smem:[#allocation0]]
  $region49: #{tpu_custom_call.1} parent=0
    _
  %s5 = ssub.s32 1, %s3
  %s6 = scalar_select 0, %s5, %s3
  $region1: #{tpu_custom_call.1} parent=0
    #allocation2 [shape = 'u8[32768]{0}', space=vmem, size = 0x8000, scoped, tag = 'input window, operand 0']
    #allocation3 [shape = 's32[2]{0}', space=sflag, size = 0x8, scoped, tag = 'scoped memory for tpu_custom_call.1']
    #allocation4 [shape = 's32[2]{0}', space=sflag, size = 0x8, scoped, tag = 'scoped memory for tpu_custom_call.1']
    #allocation5 [shape = 'u8[32768]{0}', space=vmem, size = 0x8000, scoped, tag = 'input window, operand 1']
    #allocation6 [shape = 's32[2]{0}', space=sflag, size = 0x8, scoped, tag = 'scoped memory for tpu_custom_call.1']
    #allocation7 [shape = 'u8[8192]{0}', space=vmem, size = 0x2000, scoped, tag = 'output window, operand 0']
    %7 = vsyncpa [#allocation3], 0
    %s8 = scalar_lea.sflag [#allocation3], 1
    %9 = vsyncpa %s8, 0
    %10 = vsyncpa [#allocation6], 0
    %s11 = scalar_lea.sflag [#allocation6], 1
    %12 = vsyncpa %s11, 0
    %13 = vsyncpa [#allocation4], 0
    %s14 = scalar_lea.sflag [#allocation4], 1
    %15 = vsyncpa %s14, 0
    loop: start=0, step=1, limit=4
    $region2: #{tpu_custom_call.1} parent=1 // loop_pre_header
      _
    $region3: #{tpu_custom_call.1} parent=1 // loop_header
      %s17 = sphi 0, %s21
      %p18 = scmp.ge.s32.totalorder %s17, 4
      %s24 = sphi 0, %s36
      %s25 = sphi 0, %s32
      %s26 = sphi 0, %s24
      %s27 = sphi 0, %s25
      %s28 = sphi 0, %s26
      %s29 = sphi 0, %s27
      %s41 = sphi 0, %s43
      %s44 = sphi 0, %s41
      %s45 = sphi 0, %s44
      %s61 = sphi 0, %s45
      %s69 = sphi 0, %s71
      %s72 = sphi 0, %s69
      %s73 = sphi 0, %s72
      %s89 = sphi 0, %s73
      %s97 = sphi 0, %s99
      %s100 = sphi 0, %s97
      %s101 = sphi 0, %s100
      %s117 = sphi 0, %s101
    $region4: #{tpu_custom_call.1} parent=1 // loop_header_branch
      %20 = sbr.rel (%p18) target = $region8
    $region5: #{tpu_custom_call.1} parent=1 // loop_body
      %s22 = ssub.s32 %s17, 1
      %s23 = ssub.s32 %s17, 2
      %s30 = sadd.s32 1, %s25
      %p31 = scmp.ge.s32.totalorder %s30, 1
      %s32 = scalar_select %p31, 0, %s30
      %s33 = sadd.s32 1, %s24
      %s34 = scalar_select %p31, %s33, %s24
      %p35 = scmp.ge.s32.totalorder %s34, 2
      %s36 = scalar_select %p35, 0, %s34
      %s37 = ssub.s32 %s24, %s36
      %s38 = ssub.s32 %s25, %s32
      %s39 = sor.u32 %s37, %s38
      %p40 = scmp.eq.s32.totalorder %s39, 0
      %s42 = sadd.s32 %s41, 1
      %s43 = scalar_select %p40, %s41, %s42
      %p46 = pneg %p40
      %p47 = scmp.eq.s32.totalorder %s17, 1
      %p48 = por %p46, %p47
      %p49 = scmp.ne.s32.totalorder %s41, %s44
      %p50 = scmp.eq.s32.totalorder %s17, 0
      %p51 = por %p49, %p50
      %p52 = scmp.ne.s32.totalorder %s41, %s44
      %p53 = scmp.eq.s32.totalorder %s22, 1
      %p54 = por %p52, %p53
      %p55 = scmp.ne.s32.totalorder %s44, %s45
      %p56 = scmp.eq.s32.totalorder %s22, 0
      %p57 = por %p55, %p56
      %p58 = scmp.ne.s32.totalorder %s44, %s45
      %p59 = scmp.eq.s32.totalorder %s23, 1
      %p60 = por %p58, %p59
      %p62 = scmp.ne.s32.totalorder %s45, %s61
      %p63 = scmp.eq.s32.totalorder %s23, 0
      %p64 = por %p62, %p63
      %s65 = ssub.s32 %s24, %s36
      %s66 = ssub.s32 %s25, %s32
      %s67 = sor.u32 %s65, %s66
      %p68 = scmp.eq.s32.totalorder %s67, 0
      %s70 = sadd.s32 %s69, 1
      %s71 = scalar_select %p68, %s69, %s70
      %p74 = pneg %p68
      %p75 = scmp.eq.s32.totalorder %s17, 1
      %p76 = por %p74, %p75
      %p77 = scmp.ne.s32.totalorder %s69, %s72
      %p78 = scmp.eq.s32.totalorder %s17, 0
      %p79 = por %p77, %p78
      %p80 = scmp.ne.s32.totalorder %s69, %s72
      %p81 = scmp.eq.s32.totalorder %s22, 1
      %p82 = por %p80, %p81
      %p83 = scmp.ne.s32.totalorder %s72, %s73
      %p84 = scmp.eq.s32.totalorder %s22, 0
      %p85 = por %p83, %p84
      %p86 = scmp.ne.s32.totalorder %s72, %s73
      %p87 = scmp.eq.s32.totalorder %s23, 1
      %p88 = por %p86, %p87
      %p90 = scmp.ne.s32.totalorder %s73, %s89
      %p91 = scmp.eq.s32.totalorder %s23, 0
      %p92 = por %p90, %p91
      %s93 = ssub.s32 %s24, %s36
      %s94 = ssub.s32 %s25, %s32
      %s95 = sor.u32 %s93, %s94
      %p96 = scmp.eq.s32.totalorder %s95, 0
      %s98 = sadd.s32 %s97, 1
      %s99 = scalar_select %p96, %s97, %s98
      %p102 = pneg %p96
      %p103 = scmp.eq.s32.totalorder %s17, 1
      %p104 = por %p102, %p103
      %p105 = scmp.ne.s32.totalorder %s97, %s100
      %p106 = scmp.eq.s32.totalorder %s17, 0
      %p107 = por %p105, %p106
      %p108 = scmp.ne.s32.totalorder %s97, %s100
      %p109 = scmp.eq.s32.totalorder %s22, 1
      %p110 = por %p108, %p109
      %p111 = scmp.ne.s32.totalorder %s100, %s101
      %p112 = scmp.eq.s32.totalorder %s22, 0
      %p113 = por %p111, %p112
      %p114 = scmp.ne.s32.totalorder %s100, %s101
      %p115 = scmp.eq.s32.totalorder %s23, 1
      %p116 = por %p114, %p115
      %p118 = scmp.ne.s32.totalorder %s101, %s117
      %p119 = scmp.eq.s32.totalorder %s23, 0
      %p120 = por %p118, %p119
      %p121 = scmp.le.s32.totalorder 1, %s17
      %p122 = scmp.lt.s32.totalorder %s17, 3
      %p123 = pnand %p121, %p122
      %p124 = pneg %p123
      // Predicated region
      $region9: #{tpu_custom_call.1} parent=5 // pred_check
        _
      $region10: #{tpu_custom_call.1} parent=5 // pred_check_branch
        %126 = sbr.rel (%p123) target = $region12
      $region11: #{tpu_custom_call.1} parent=5 // pred_region
        %s127 = ssub.s32 %s17, 1
      $region12: #{tpu_custom_call.1} parent=5 // pred_fallthru
        _
      %p128 = scmp.lt.s32.totalorder %s17, 2
      // Predicated region
      $region13: #{tpu_custom_call.1} parent=5 // pred_check
        %p129 = pneg %p128
      $region14: #{tpu_custom_call.1} parent=5 // pred_check_branch
        %131 = sbr.rel (%p129) target = $region16
      $region15: #{tpu_custom_call.1} parent=5 // pred_region
        // Predicated region
        $region17: #{tpu_custom_call.1} parent=15 // pred_check
          %p132 = pneg %p51
        $region18: #{tpu_custom_call.1} parent=15 // pred_check_branch
          %134 = sbr.rel (%p132) target = $region20
        $region19: #{tpu_custom_call.1} parent=15 // pred_region
          %s135 = sand.u32 %s41, 1
          %s136 = scalar_lea.sflag [#allocation3], %s135
          %s137 = sand.u32 %s41, 1
          %s138 = smul.addr %s137, 32
          %s139 = scalar_lea.vmem [#allocation2], %s138
          %s141 = ssub.s32 512, 512
          %142 = vsyncadd %s136, %s141
          %s143 = smul.addr %s24, 4
          %s144 = sadd.s32 %s25, %s143
          %s145 = smul.addr %s144, 128
          %s146 = scalar_lea.hbm %s0, %s145
          %s147 = sshll.u32 %s139, 4
          %s148 = int_to_ptr.vmem [resolvable:$true] %s147
          %153 = dma.hbm_to_vmem [thread:$0]  %s146, 512, %s148, %s136, 128, 128, 8
        $region20: #{tpu_custom_call.1} parent=15 // pred_fallthru
          _
        // Predicated region
        $region21: #{tpu_custom_call.1} parent=15 // pred_check
          %p154 = pneg %p79
        $region22: #{tpu_custom_call.1} parent=15 // pred_check_branch
          %156 = sbr.rel (%p154) target = $region24
        $region23: #{tpu_custom_call.1} parent=15 // pred_region
          %s157 = sand.u32 %s69, 1
          %s158 = scalar_lea.sflag [#allocation6], %s157
          %s159 = sand.u32 %s69, 1
          %s160 = smul.addr %s159, 32
          %s161 = scalar_lea.vmem [#allocation5], %s160
          %s163 = ssub.s32 512, 512
          %164 = vsyncadd %s158, %s163
          %s165 = smul.addr %s24, 4
          %s166 = sadd.s32 %s25, %s165
          %s167 = smul.addr %s166, 128
          %s168 = scalar_lea.hbm %s1, %s167
          %s169 = sshll.u32 %s161, 4
          %s170 = int_to_ptr.vmem [resolvable:$true] %s169
          %175 = dma.hbm_to_vmem [thread:$0]  %s168, 512, %s170, %s158, 128, 128, 8
        $region24: #{tpu_custom_call.1} parent=15 // pred_fallthru
          _
      $region16: #{tpu_custom_call.1} parent=5 // pred_fallthru
        _
      %p176 = scmp.le.s32.totalorder 1, %s17
      %p177 = scmp.lt.s32.totalorder %s17, 3
      %p178 = pnand %p176, %p177
      %p179 = pneg %p178
      // Predicated region
      $region25: #{tpu_custom_call.1} parent=5 // pred_check
        _
      $region26: #{tpu_custom_call.1} parent=5 // pred_check_branch
        %181 = sbr.rel (%p178) target = $region28
      $region27: #{tpu_custom_call.1} parent=5 // pred_region
        %s182 = ssub.s32 %s17, 1
        %s183 = sand.u32 %s44, 1
        %s184 = scalar_lea.sflag [#allocation3], %s183
        %s185 = sand.u32 %s44, 1
        %s186 = smul.addr %s185, 32
        %s187 = scalar_lea.vmem [#allocation2], %s186
        // Predicated region
        $region29: #{tpu_custom_call.1} parent=27 // pred_check
          %p188 = pneg %p57
        $region30: #{tpu_custom_call.1} parent=27 // pred_check_branch
          %190 = sbr.rel (%p188) target = $region32
        $region31: #{tpu_custom_call.1} parent=27 // pred_region
          %191 = dma.done %s184, 512
        $region32: #{tpu_custom_call.1} parent=27 // pred_fallthru
          _
        %s192 = sand.u32 %s72, 1
        %s193 = scalar_lea.sflag [#allocation6], %s192
        %s194 = sand.u32 %s72, 1
        %s195 = smul.addr %s194, 32
        %s196 = scalar_lea.vmem [#allocation5], %s195
        // Predicated region
        $region33: #{tpu_custom_call.1} parent=27 // pred_check
          %p197 = pneg %p85
        $region34: #{tpu_custom_call.1} parent=27 // pred_check_branch
          %199 = sbr.rel (%p197) target = $region36
        $region35: #{tpu_custom_call.1} parent=27 // pred_region
          %200 = dma.done %s193, 512
        $region36: #{tpu_custom_call.1} parent=27 // pred_fallthru
          _
        %s201 = sand.u32 %s44, 1
        %s202 = scalar_lea.sflag [#allocation3], %s201
        %s203 = sand.u32 %s44, 1
        %s204 = smul.addr %s203, 32
        %s205 = scalar_lea.vmem [#allocation2], %s204
        %p206 = pneg %p57
        %p207 = pneg %p54
        %s208 = sand.u32 %s72, 1
        %s209 = scalar_lea.sflag [#allocation6], %s208
        %s210 = sand.u32 %s72, 1
        %s211 = smul.addr %s210, 32
        %s212 = scalar_lea.vmem [#allocation5], %s211
        %p213 = pneg %p85
        %p214 = pneg %p82
        %p215 = pneg %p113
        %p216 = pneg %p110
        %s217 = sand.u32 %s100, 1
        %s218 = scalar_lea.sflag [#allocation4], %s217
        %s219 = sand.u32 %s100, 1
        %s220 = smul.addr %s219, 8
        %s221 = scalar_lea.vmem [#allocation7], %s220
        %v222 = vld [vmem:[%s187] sm:$0xff]
        %v223 = vld [vmem:[%s196] sm:$0xff]
        %v224 = vsub.f32 %v222, %v223
        %v225 = vand.u32 2147483647, %v224
        %v226 = vadd.f32 %v225, 0.0
        %s227 = scalar_lea.vmem %s187, 8 [#allocation2]
        %v228 = vld [vmem:[%s227] sm:$0xff]
        %s229 = scalar_lea.vmem %s196, 8 [#allocation5]
        %v230 = vld [vmem:[%s229] sm:$0xff]
        %v231 = vsub.f32 %v228, %v230
        %v232 = vand.u32 2147483647, %v231
        %v233 = vadd.f32 %v226, %v232
        %s234 = scalar_lea.vmem %s187, 16 [#allocation2]
        %v235 = vld [vmem:[%s234] sm:$0xff]
        %s236 = scalar_lea.vmem %s196, 16 [#allocation5]
        %v237 = vld [vmem:[%s236] sm:$0xff]
        %v238 = vsub.f32 %v235, %v237
        %v239 = vand.u32 2147483647, %v238
        %v240 = vadd.f32 %v233, %v239
        %s241 = scalar_lea.vmem %s187, 24 [#allocation2]
        %v242 = vld [vmem:[%s241] sm:$0xff]
        %s243 = scalar_lea.vmem %s196, 24 [#allocation5]
        %v244 = vld [vmem:[%s243] sm:$0xff]
        %v245 = vsub.f32 %v242, %v244
        %v246 = vand.u32 2147483647, %v245
        %v247 = vadd.f32 %v240, %v246
        %248 = vst [vmem:[%s221] sm:$0xff] %v247
        %s249 = sand.u32 %s100, 1
        %s250 = scalar_lea.sflag [#allocation4], %s249
        %s251 = sand.u32 %s100, 1
        %s252 = smul.addr %s251, 8
        %s253 = scalar_lea.vmem [#allocation7], %s252
        // Predicated region
        $region37: #{tpu_custom_call.1} parent=27 // pred_check
          %p254 = pneg %p110
        $region38: #{tpu_custom_call.1} parent=27 // pred_check_branch
          %256 = sbr.rel (%p254) target = $region40
        $region39: #{tpu_custom_call.1} parent=27 // pred_region
          %s258 = ssub.s32 128, 128
          %259 = vsyncadd %s250, %s258
          %s260 = sadd.s32 %s27, %s26
          %s261 = smul.addr %s260, 128
          %s262 = scalar_lea.hbm %s2, %s261
          %s264 = sshll.u32 %s253, 4
          %s265 = int_to_ptr.vmem [resolvable:$true] %s264
          %267 = dma.vmem_to_hbm [thread:$0]  %s265, 128, %s262, %s250
        $region40: #{tpu_custom_call.1} parent=27 // pred_fallthru
          _
      $region28: #{tpu_custom_call.1} parent=5 // pred_fallthru
        _
      %p268 = scmp.le.s32.totalorder 2, %s17
      // Predicated region
      $region41: #{tpu_custom_call.1} parent=5 // pred_check
        %p269 = pneg %p268
      $region42: #{tpu_custom_call.1} parent=5 // pred_check_branch
        %271 = sbr.rel (%p269) target = $region44
      $region43: #{tpu_custom_call.1} parent=5 // pred_region
        %s272 = ssub.s32 %s17, 2
        // Predicated region
        $region45: #{tpu_custom_call.1} parent=43 // pred_check
          %p273 = pneg %p116
        $region46: #{tpu_custom_call.1} parent=43 // pred_check_branch
          %275 = sbr.rel (%p273) target = $region48
        $region47: #{tpu_custom_call.1} parent=43 // pred_region
          %s276 = sand.u32 %s101, 1
          %s277 = scalar_lea.sflag [#allocation4], %s276
          %s278 = sand.u32 %s101, 1
          %s279 = smul.addr %s278, 8
          %s280 = scalar_lea.vmem [#allocation7], %s279
          %281 = dma.done %s277, 128
        $region48: #{tpu_custom_call.1} parent=43 // pred_fallthru
          _
      $region44: #{tpu_custom_call.1} parent=5 // pred_fallthru
        _
    $region6: #{tpu_custom_call.1} parent=1 // loop_footer
      %s21 = sadd.s32 1, %s17
    $region7: #{tpu_custom_call.1} parent=1 // loop_footer_branch
      %16 = sbr.rel target = $region3
    $region8: #{tpu_custom_call.1} parent=1 // loop_exit
      _
    %282 = vsyncpa [#allocation3], 1
    %s283 = scalar_lea.sflag [#allocation3], 1
    %284 = vsyncpa %s283, 1
    %285 = vsyncpa [#allocation6], 1
    %s286 = scalar_lea.sflag [#allocation6], 1
    %287 = vsyncpa %s286, 1
    %288 = vsyncpa [#allocation4], 1
    %s289 = scalar_lea.sflag [#allocation4], 1
    %290 = vsyncpa %s289, 1

</llo_original>
